<compile_context>
chip_gen: v5e
topology: v5e:2x2
jax: 0.10.0
libtpu: 0.0.40
codegen_flags: <defaults>
</compile_context>

<pallas_src>
import functools

import jax
import jax.numpy as jnp
from jax.experimental import pallas as pl
from jax.experimental.pallas import tpu as pltpu


# ----------------------------- kernel ---------------------------------------


def _se_block_kernel(x_ref, w1_ref, w2_ref, o_ref, *, native_dtype_scale: bool):
    # x_ref / o_ref: (Bt, C, HW) slab; w1_ref: (C, Cr); w2_ref: (Cr, C)
    hw = x_ref.shape[-1]

    # Squeeze: global average pool.  Lane-axis reduction with f32 accumulation;
    # the 1/HW is applied to the tiny pooled vector (no full-tile multiply and
    # no full-tile f32 copy kept alive across the body).
    y = jnp.sum(x_ref[...], axis=-1, dtype=jnp.float32) * (1.0 / hw)   # (Bt, C)

    # Excitation MLP, batched over the Bt rows of this slab: one small matmul
    # per grid step instead of a 1-row matmul per sample.
    w1 = w1_ref[...].astype(jnp.float32)                               # (C, Cr)
    w2 = w2_ref[...].astype(jnp.float32)                               # (Cr, C)
    h = jnp.maximum(jnp.dot(y, w1, preferred_element_type=jnp.float32), 0.0)
    s = jax.nn.sigmoid(jnp.dot(h, w2, preferred_element_type=jnp.float32))

    # Scale: broadcast the per-channel gate over HW.  Multiply in the input's
    # native dtype (packed bf16 VALU on v6e/v7x); keep f32 on v5e (no bf16 VPU).
    gate = s[:, :, None]                                               # (Bt, C, 1)
    if native_dtype_scale:
        gate = gate.astype(x_ref.dtype)
    o_ref[...] = (x_ref[...] * gate).astype(o_ref.dtype)


# --------------------------- wrapper helpers --------------------------------


def _vmem_capacity_bytes() -> int:
    try:
        return int(pltpu.get_tpu_info().vmem_capacity_bytes)
    except Exception:
        return 64 * 1024 * 1024  # conservative: v7x per-TensorCore VMEM


def _is_v5_tpu() -> bool:
    try:
        return "v5" in jax.devices()[0].device_kind.lower()
    except Exception:
        return False


def _ceil_to(x: int, m: int) -> int:
    return -(-x // m) * m


def _pick_batch_tile(batch: int, bytes_per_batch: int, vmem_budget: int) -> int:
    """Largest divisor of `batch` whose (in+out, double-buffered) slab working
    set fits comfortably in VMEM, while keeping >=2 grid steps so both v7x
    TensorCores get work."""
    usable = int(0.45 * vmem_budget)
    divisors = [d for d in range(1, batch + 1) if batch % d == 0]
    fitting = [d for d in divisors if 4 * d * bytes_per_batch <= usable] or [1]
    # TODO(synk): if even a single (1, C, HW) slab overflows VMEM (very large
    # C*H*W on v7x's 64 MiB), fall back to a two-pass squeeze-then-scale kernel.
    preferred = [d for d in fitting if batch // d >= 2]
    return max(preferred) if preferred else max(fitting)


# ------------------------------ wrapper --------------------------------------


def se_block(x, w1, w2, *, block_batch=None, native_dtype_scale=None):
    """x: (B, C, H, W) NCHW; w1: (C, C//r); w2: (C//r, C).

    w1/w2 are stored as (in, out), i.e. PyTorch's Linear weight (out, in)
    transposed, so the kernel computes y @ w1 and h @ w2.
    """
    B, C, H, W = x.shape
    HW = H * W
    Cr = w1.shape[1]
    assert w1.shape == (C, Cr) and w2.shape == (Cr, C)

    # TODO(synk): for feature maps where H*W is not a multiple of 128 (e.g. 7x7),
    # an NHWC-style (B, HW, C) flattening with C % 128 == 0 keeps the stores
    # lane-dense; not needed for the 128-aligned demo shapes used here.
    x_flat = x.reshape(B, C, HW)

    itemsize = x.dtype.itemsize
    bytes_per_batch = C * HW * itemsize
    vmem_budget = _vmem_capacity_bytes()

    if block_batch is None:
        block_batch = _pick_batch_tile(B, bytes_per_batch, vmem_budget)
    bt = int(block_batch)
    assert B % bt == 0, "block_batch must divide the batch size"

    if native_dtype_scale is None:
        # v5e's VPU has no native bf16 ALU -> keep the scale multiply in f32 there.
        native_dtype_scale = (x.dtype == jnp.float32) or not _is_v5_tpu()

    # VMEM working set per step: in + out slabs, double-buffered, plus the
    # (lane-padded, double-buffered) weights and a little slack.
    w_itemsize = w1.dtype.itemsize
    weight_bytes = 2 * w_itemsize * (
        _ceil_to(C, 8) * _ceil_to(Cr, 128) + _ceil_to(Cr, 8) * _ceil_to(C, 128)
    )
    needed = 4 * bt * bytes_per_batch + weight_bytes + (2 << 20)
    vmem_limit = int(min(max(2 * needed, 32 * 1024 * 1024), 0.9 * vmem_budget))

    kernel = functools.partial(
        _se_block_kernel, native_dtype_scale=bool(native_dtype_scale)
    )

    out_flat = pl.pallas_call(
        kernel,
        out_shape=jax.ShapeDtypeStruct((B, C, HW), x.dtype),
        grid_spec=pltpu.PrefetchScalarGridSpec(
            num_scalar_prefetch=0,
            grid=(B // bt,),
            in_specs=[
                pl.BlockSpec((bt, C, HW), lambda b: (b, 0, 0)),
                # Constant index_map -> weights are fetched once and not
                # re-DMA'd per step.  (Their double-buffer reservation is only
                # a few tens of KB after lane padding; left at the default
                # buffering for portability.)
                pl.BlockSpec((C, Cr), lambda b: (0, 0)),
                pl.BlockSpec((Cr, C), lambda b: (0, 0)),
            ],
            out_specs=pl.BlockSpec((bt, C, HW), lambda b: (b, 0, 0)),
        ),
        compiler_params=pltpu.CompilerParams(
            dimension_semantics=("parallel",),
            vmem_limit_bytes=vmem_limit,
        ),
    )(x_flat, w1, w2)

    return out_flat.reshape(B, C, H, W)


# ----------------------------- reference -------------------------------------


def reference_se_block(x, w1, w2):
    # Pure-JAX reference mirroring PyTorch SEBlock semantics.
    y = jnp.mean(x.astype(jnp.float32), axis=(2, 3))            # (B, C)
    h = jnp.maximum(y @ w1, 0.0)                                 # (B, C//r)
    s = jax.nn.sigmoid(h @ w2)                                   # (B, C)
    return (x.astype(jnp.float32) * s[:, :, None, None]).astype(x.dtype)


if __name__ == "__main__":
    key = jax.random.PRNGKey(0)
    k_x, k_w1, k_w2 = jax.random.split(key, 3)

    B, C, H, W = 8, 32, 16, 16          # HW = 256 -> lane dim is 128-aligned
    reduction = 16
    Cr = C // reduction                 # 2

    x = jax.random.normal(k_x, (B, C, H, W), dtype=jnp.float32)
    # Weights stored (in, out): equal PyTorch Linear weight (out, in) transposed.
    w1 = jax.random.normal(k_w1, (C, Cr), dtype=jnp.float32) * 0.1
    w2 = jax.random.normal(k_w2, (Cr, C), dtype=jnp.float32) * 0.1

    out = jax.block_until_ready(se_block(x, w1, w2))
    ref = reference_se_block(x, w1, w2)

    assert out.shape == (B, C, H, W)
    assert jnp.allclose(out, ref, atol=1e-5, rtol=1e-5), "mismatch vs reference"
    print("KERNEL_OK")
</pallas_src>

<mosaic_0001>
module attributes {stable_mosaic.version = 11 : i64} {
  func.func @_se_block_kernel(%arg0: i32, %arg1: memref<4x32x256xf32, #tpu.memory_space<vmem>>, %arg2: memref<32x2xf32, #tpu.memory_space<vmem>>, %arg3: memref<2x32xf32, #tpu.memory_space<vmem>>, %arg4: memref<4x32x256xf32, #tpu.memory_space<vmem>>) attributes {dimension_semantics = [#tpu.dimension_semantics<parallel>], iteration_bounds = array<i64: 2>, scalar_prefetch = 0 : i64, scratch_operands = 0 : i64, tpu.core_type = #tpu.core_type<tc>, window_params = [{transform_indices = @transform_0, window_bounds = array<i64: 4, 32, 256>}, {pipeline_mode = #tpu.pipeline_mode<synchronous>, transform_indices = @transform_1, window_bounds = array<i64: 32, 2>}, {pipeline_mode = #tpu.pipeline_mode<synchronous>, transform_indices = @transform_2, window_bounds = array<i64: 2, 32>}, {transform_indices = @transform_3, window_bounds = array<i64: 4, 32, 256>}]} {
    %c0 = arith.constant 0 : index
    %c0_0 = arith.constant 0 : index
    %c0_1 = arith.constant 0 : index
    %0 = vector.load %arg1[%c0, %c0_0, %c0_1] : memref<4x32x256xf32, #tpu.memory_space<vmem>>, vector<4x32x256xf32>
    %cst = arith.constant dense<0.000000e+00> : vector<4x32xf32>
    %1 = vector.multi_reduction <add>, %0, %cst [2] : vector<4x32x256xf32> to vector<4x32xf32>
    %cst_2 = arith.constant 3.906250e-03 : f32
    %2 = vector.broadcast %cst_2 : f32 to vector<4x32xf32>
    %3 = arith.mulf %1, %2 : vector<4x32xf32>
    %c0_3 = arith.constant 0 : index
    %c0_4 = arith.constant 0 : index
    %4 = vector.load %arg2[%c0_3, %c0_4] : memref<32x2xf32, #tpu.memory_space<vmem>>, vector<32x2xf32>
    %c0_5 = arith.constant 0 : index
    %c0_6 = arith.constant 0 : index
    %5 = vector.load %arg3[%c0_5, %c0_6] : memref<2x32xf32, #tpu.memory_space<vmem>>, vector<2x32xf32>
    %cst_7 = arith.constant dense<0.000000e+00> : vector<4x2xf32>
    %6 = tpu.matmul %3, %4, %cst_7 {dimension_numbers = #tpu.dot_dimension_numbers<[1], [0], [0], [1], [0, 0, 1, 1], [], []>} : vector<4x32xf32>, vector<32x2xf32>, vector<4x2xf32> -> vector<4x2xf32>
    %cst_8 = arith.constant 0.000000e+00 : f32
    %7 = vector.broadcast %cst_8 : f32 to vector<4x2xf32>
    %8 = arith.maximumf %6, %7 : vector<4x2xf32>
    %cst_9 = arith.constant dense<0.000000e+00> : vector<4x32xf32>
    %9 = tpu.matmul %8, %5, %cst_9 {dimension_numbers = #tpu.dot_dimension_numbers<[1], [0], [0], [1], [0, 0, 1, 1], [], []>} : vector<4x2xf32>, vector<2x32xf32>, vector<4x32xf32> -> vector<4x32xf32>
    %10 = arith.negf %9 : vector<4x32xf32>
    %11 = math.exp %10 : vector<4x32xf32>
    %cst_10 = arith.constant 1.000000e+00 : f32
    %12 = vector.broadcast %cst_10 : f32 to vector<4x32xf32>
    %13 = arith.addf %12, %11 : vector<4x32xf32>
    %14 = arith.divf %12, %13 : vector<4x32xf32>
    %15 = vector.shape_cast %14 : vector<4x32xf32> to vector<4x32x1xf32>
    %c0_11 = arith.constant 0 : index
    %c0_12 = arith.constant 0 : index
    %c0_13 = arith.constant 0 : index
    %16 = vector.load %arg1[%c0_11, %c0_12, %c0_13] : memref<4x32x256xf32, #tpu.memory_space<vmem>>, vector<4x32x256xf32>
    %17 = vector.broadcast %15 : vector<4x32x1xf32> to vector<4x32x256xf32>
    %18 = arith.mulf %16, %17 : vector<4x32x256xf32>
    %c0_14 = arith.constant 0 : index
    %c0_15 = arith.constant 0 : index
    %c0_16 = arith.constant 0 : index
    %19 = vector.load %arg4[%c0_14, %c0_15, %c0_16] : memref<4x32x256xf32, #tpu.memory_space<vmem>>, vector<4x32x256xf32>
    tpu.vector_store %arg4[%c0_14, %c0_15, %c0_16], %18 {strides = array<i32>} : memref<4x32x256xf32, #tpu.memory_space<vmem>>, vector<4x32x256xf32>,
    return
  }
  func.func @transform_0(%arg0: i32) -> (i32, i32, i32) {
    %c0_i32 = arith.constant 0 : i32
    %c0_i32_0 = arith.constant 0 : i32
    %c0_i32_1 = arith.constant 0 : i32
    return %arg0, %c0_i32, %c0_i32_0 : i32, i32, i32
  }
  func.func @transform_1(%arg0: i32) -> (i32, i32) {
    %c0_i32 = arith.constant 0 : i32
    %c0_i32_0 = arith.constant 0 : i32
    %c0_i32_1 = arith.constant 0 : i32
    return %c0_i32, %c0_i32_0 : i32, i32
  }
  func.func @transform_2(%arg0: i32) -> (i32, i32) {
    %c0_i32 = arith.constant 0 : i32
    %c0_i32_0 = arith.constant 0 : i32
    %c0_i32_1 = arith.constant 0 : i32
    return %c0_i32, %c0_i32_0 : i32, i32
  }
  func.func @transform_3(%arg0: i32) -> (i32, i32, i32) {
    %c0_i32 = arith.constant 0 : i32
    %c0_i32_0 = arith.constant 0 : i32
    %c0_i32_1 = arith.constant 0 : i32
    return %arg0, %c0_i32, %c0_i32_0 : i32, i32, i32
  }
}

</mosaic_0001>

<llo_original>
// kernel: tpu_custom_call.1
$region0: #{tpu_custom_call.1}
  #allocation0 [shape = 'u32[]', space=smem, size = 0x4, offset = 0x4, fixed_abs, tag = 'smem constant byte address 0x4 - core index']
  #allocation1 [shape = 'u32[72,128]{1,0:T(1,128)}', space=vmem, size = 0x9000, scoped, tag = 'internal scratch']
  %s0 = inlined_call_operand.hbm [shape: f32[8,32,256], index: 0, kind: input, shape index: {}]
  %s1 = inlined_call_operand.vmem [shape: f32[32,2], index: 1, kind: input, shape index: {}]
  %s2 = inlined_call_operand.vmem [shape: f32[2,32], index: 2, kind: input, shape index: {}]
  %s3 = inlined_call_operand.hbm [shape: f32[8,32,256], index: 3, kind: output, shape index: {}]
  %s4 = sld [smem:[#allocation0]]
  $region49: #{tpu_custom_call.1} parent=0
    _
  %s6 = ssub.s32 1, %s4
  %s7 = scalar_select 0, %s6, %s4
  $region1: #{tpu_custom_call.1} parent=0
    #allocation2 [shape = 'u8[262144]{0}', space=vmem, size = 0x40000, scoped, tag = 'input window, operand 0']
    #allocation3 [shape = 's32[2]{0}', space=sflag, size = 0x8, scoped, tag = 'scoped memory for tpu_custom_call.1']
    #allocation4 [shape = 's32[2]{0}', space=sflag, size = 0x8, scoped, tag = 'scoped memory for tpu_custom_call.1']
    #allocation5 [shape = 'u8[262144]{0}', space=vmem, size = 0x40000, scoped, tag = 'output window, operand 0']
    %8 = vsyncpa [#allocation3], 0
    %s9 = scalar_lea.sflag [#allocation3], 1
    %10 = vsyncpa %s9, 0
    %11 = vsyncpa [#allocation4], 0
    %s12 = scalar_lea.sflag [#allocation4], 1
    %13 = vsyncpa %s12, 0
    loop: start=0, step=1, limit=4
    $region2: #{tpu_custom_call.1} parent=1 // loop_pre_header
      _
    $region3: #{tpu_custom_call.1} parent=1 // loop_header
      %s15 = sphi 0, %s19
      %p16 = scmp.ge.s32.totalorder %s15, 4
      %s25 = sphi 0, %s27
      %s28 = sphi 0, %s25
      %s29 = sphi 0, %s28
      %s45 = sphi 0, %s29
      %s49 = sphi 0, %s49
      %s51 = sphi 0, %s49
      %s52 = sphi 0, %s51
      %s66 = sphi 0, %s52
      %s70 = sphi 0, %s70
      %s72 = sphi 0, %s70
      %s73 = sphi 0, %s72
      %s87 = sphi 0, %s73
      %s93 = sphi 0, %s95
      %s96 = sphi 0, %s93
      %s97 = sphi 0, %s96
      %s113 = sphi 0, %s97
    $region4: #{tpu_custom_call.1} parent=1 // loop_header_branch
      %18 = sbr.rel (%p16) target = $region8
    $region5: #{tpu_custom_call.1} parent=1 // loop_body
      %s20 = ssub.s32 %s15, 1
      %s21 = ssub.s32 %s15, 2
      %s22 = sadd.s32 %s15, 1
      %s23 = ssub.s32 %s15, %s22
      %p24 = scmp.eq.s32.totalorder %s23, 0
      %s26 = sadd.s32 %s25, 1
      %s27 = scalar_select %p24, %s25, %s26
      %p30 = pneg %p24
      %p31 = scmp.eq.s32.totalorder %s15, 1
      %p32 = por %p30, %p31
      %p33 = scmp.ne.s32.totalorder %s25, %s28
      %p34 = scmp.eq.s32.totalorder %s15, 0
      %p35 = por %p33, %p34
      %p36 = scmp.ne.s32.totalorder %s25, %s28
      %p37 = scmp.eq.s32.totalorder %s20, 1
      %p38 = por %p36, %p37
      %p39 = scmp.ne.s32.totalorder %s28, %s29
      %p40 = scmp.eq.s32.totalorder %s20, 0
      %p41 = por %p39, %p40
      %p42 = scmp.ne.s32.totalorder %s28, %s29
      %p43 = scmp.eq.s32.totalorder %s21, 1
      %p44 = por %p42, %p43
      %p46 = scmp.ne.s32.totalorder %s29, %s45
      %p47 = scmp.eq.s32.totalorder %s21, 0
      %p48 = por %p46, %p47
      %s50 = sadd.s32 %s49, 1
      %p53 = scmp.eq.s32.totalorder %s15, 1
      %p54 = scmp.ne.s32.totalorder %s49, %s51
      %p55 = scmp.eq.s32.totalorder %s15, 0
      %p56 = por %p54, %p55
      %p57 = scmp.ne.s32.totalorder %s49, %s51
      %p58 = scmp.eq.s32.totalorder %s20, 1
      %p59 = por %p57, %p58
      %p60 = scmp.ne.s32.totalorder %s51, %s52
      %p61 = scmp.eq.s32.totalorder %s20, 0
      %p62 = por %p60, %p61
      %p63 = scmp.ne.s32.totalorder %s51, %s52
      %p64 = scmp.eq.s32.totalorder %s21, 1
      %p65 = por %p63, %p64
      %p67 = scmp.ne.s32.totalorder %s52, %s66
      %p68 = scmp.eq.s32.totalorder %s21, 0
      %p69 = por %p67, %p68
      %s71 = sadd.s32 %s70, 1
      %p74 = scmp.eq.s32.totalorder %s15, 1
      %p75 = scmp.ne.s32.totalorder %s70, %s72
      %p76 = scmp.eq.s32.totalorder %s15, 0
      %p77 = por %p75, %p76
      %p78 = scmp.ne.s32.totalorder %s70, %s72
      %p79 = scmp.eq.s32.totalorder %s20, 1
      %p80 = por %p78, %p79
      %p81 = scmp.ne.s32.totalorder %s72, %s73
      %p82 = scmp.eq.s32.totalorder %s20, 0
      %p83 = por %p81, %p82
      %p84 = scmp.ne.s32.totalorder %s72, %s73
      %p85 = scmp.eq.s32.totalorder %s21, 1
      %p86 = por %p84, %p85
      %p88 = scmp.ne.s32.totalorder %s73, %s87
      %p89 = scmp.eq.s32.totalorder %s21, 0
      %p90 = por %p88, %p89
      %s91 = ssub.s32 %s15, %s22
      %p92 = scmp.eq.s32.totalorder %s91, 0
      %s94 = sadd.s32 %s93, 1
      %s95 = scalar_select %p92, %s93, %s94
      %p98 = pneg %p92
      %p99 = scmp.eq.s32.totalorder %s15, 1
      %p100 = por %p98, %p99
      %p101 = scmp.ne.s32.totalorder %s93, %s96
      %p102 = scmp.eq.s32.totalorder %s15, 0
      %p103 = por %p101, %p102
      %p104 = scmp.ne.s32.totalorder %s93, %s96
      %p105 = scmp.eq.s32.totalorder %s20, 1
      %p106 = por %p104, %p105
      %p107 = scmp.ne.s32.totalorder %s96, %s97
      %p108 = scmp.eq.s32.totalorder %s20, 0
      %p109 = por %p107, %p108
      %p110 = scmp.ne.s32.totalorder %s96, %s97
      %p111 = scmp.eq.s32.totalorder %s21, 1
      %p112 = por %p110, %p111
      %p114 = scmp.ne.s32.totalorder %s97, %s113
      %p115 = scmp.eq.s32.totalorder %s21, 0
      %p116 = por %p114, %p115
      %p117 = scmp.le.s32.totalorder 1, %s15
      %p118 = scmp.lt.s32.totalorder %s15, 3
      %p119 = pnand %p117, %p118
      %p120 = pneg %p119
      // Predicated region
      $region9: #{tpu_custom_call.1} parent=5 // pred_check
        _
      $region10: #{tpu_custom_call.1} parent=5 // pred_check_branch
        %122 = sbr.rel (%p119) target = $region12
      $region11: #{tpu_custom_call.1} parent=5 // pred_region
        %s123 = ssub.s32 %s15, 1
        // Predicated region
        $region13: #{tpu_custom_call.1} parent=11 // pred_check
          %p124 = pneg %p62
        $region14: #{tpu_custom_call.1} parent=11 // pred_check_branch
          %126 = sbr.rel (%p124) target = $region16
        $region15: #{tpu_custom_call.1} parent=11 // pred_region
          _
        $region16: #{tpu_custom_call.1} parent=11 // pred_fallthru
          _
        // Predicated region
        $region17: #{tpu_custom_call.1} parent=11 // pred_check
          %p127 = pneg %p83
        $region18: #{tpu_custom_call.1} parent=11 // pred_check_branch
          %129 = sbr.rel (%p127) target = $region20
        $region19: #{tpu_custom_call.1} parent=11 // pred_region
          _
        $region20: #{tpu_custom_call.1} parent=11 // pred_fallthru
          _
      $region12: #{tpu_custom_call.1} parent=5 // pred_fallthru
        _
      %p130 = scmp.lt.s32.totalorder %s15, 2
      // Predicated region
      $region21: #{tpu_custom_call.1} parent=5 // pred_check
        %p131 = pneg %p130
      $region22: #{tpu_custom_call.1} parent=5 // pred_check_branch
        %133 = sbr.rel (%p131) target = $region24
      $region23: #{tpu_custom_call.1} parent=5 // pred_region
        // Predicated region
        $region25: #{tpu_custom_call.1} parent=23 // pred_check
          %p134 = pneg %p35
        $region26: #{tpu_custom_call.1} parent=23 // pred_check_branch
          %136 = sbr.rel (%p134) target = $region28
        $region27: #{tpu_custom_call.1} parent=23 // pred_region
          %s137 = sand.u32 %s25, 1
          %s138 = scalar_lea.sflag [#allocation3], %s137
          %s139 = sand.u32 %s25, 1
          %s140 = smul.addr %s139, 256
          %s141 = scalar_lea.vmem [#allocation2], %s140
          %s142 = smul.u32 4, %s15
          %144 = vsyncadd %s138, 0
          %s145 = smul.addr %s142, 8
          %s146 = smul.addr %s145, 8
          %s147 = scalar_lea.hbm %s0, %s146
          %s148 = sshll.u32 %s147, 4
          %s149 = int_to_ptr.hbm [resolvable:$true] %s148
          %s150 = sshll.u32 %s141, 4
          %s151 = int_to_ptr.vmem [resolvable:$true] %s150
          %156 = dma.hbm_to_vmem [thread:$0]  %s149, 4096, %s151, %s138, 256, 256, 16
        $region28: #{tpu_custom_call.1} parent=23 // pred_fallthru
          _
      $region24: #{tpu_custom_call.1} parent=5 // pred_fallthru
        _
      %p157 = scmp.le.s32.totalorder 1, %s15
      %p158 = scmp.lt.s32.totalorder %s15, 3
      %p159 = pnand %p157, %p158
      %p160 = pneg %p159
      // Predicated region
      $region29: #{tpu_custom_call.1} parent=5 // pred_check
        _
      $region30: #{tpu_custom_call.1} parent=5 // pred_check_branch
        %162 = sbr.rel (%p159) target = $region32
      $region31: #{tpu_custom_call.1} parent=5 // pred_region
        %s163 = ssub.s32 %s15, 1
        %s164 = sand.u32 %s28, 1
        %s165 = scalar_lea.sflag [#allocation3], %s164
        %s166 = sand.u32 %s28, 1
        %s167 = smul.addr %s166, 256
        %s168 = scalar_lea.vmem [#allocation2], %s167
        // Predicated region
        $region33: #{tpu_custom_call.1} parent=31 // pred_check
          %p169 = pneg %p41
        $region34: #{tpu_custom_call.1} parent=31 // pred_check_branch
          %171 = sbr.rel (%p169) target = $region36
        $region35: #{tpu_custom_call.1} parent=31 // pred_region
          %173 = dma.done %s165, 4096
        $region36: #{tpu_custom_call.1} parent=31 // pred_fallthru
          _
        %s174 = sand.u32 %s28, 1
        %s175 = scalar_lea.sflag [#allocation3], %s174
        %s176 = sand.u32 %s28, 1
        %s177 = smul.addr %s176, 256
        %s178 = scalar_lea.vmem [#allocation2], %s177
        %p179 = pneg %p41
        %p180 = pneg %p38
        %p181 = pneg %p62
        %p182 = pneg %p59
        %p183 = pneg %p83
        %p184 = pneg %p80
        %p185 = pneg %p109
        %p186 = pneg %p106
        %s187 = sand.u32 %s96, 1
        %s188 = scalar_lea.sflag [#allocation4], %s187
        %s189 = sand.u32 %s96, 1
        %s190 = smul.addr %s189, 256
        %s191 = scalar_lea.vmem [#allocation5], %s190
        %s192 = smul.u32 4, %s20
        %s193 = smul.u32 4, %s20
        %v194 = vld [vmem:[%s168] sm:$0xff]
        %v195 = vld [vmem:[%s168 + $0x8] sm:$0xff]
        %v196 = vld [vmem:[%s168 + $0x10] sm:$0xff]
        %v197 = vld [vmem:[%s168 + $0x18] sm:$0xff]
        %v198 = vld [vmem:[%s168 + $0x20] sm:$0xff]
        %v199 = vld [vmem:[%s168 + $0x28] sm:$0xff]
        %v200 = vld [vmem:[%s168 + $0x30] sm:$0xff]
        %v201 = vld [vmem:[%s168 + $0x38] sm:$0xff]
        %v202 = vld [vmem:[%s168 + $0x40] sm:$0xff]
        %v203 = vld [vmem:[%s168 + $0x48] sm:$0xff]
        %v204 = vld [vmem:[%s168 + $0x50] sm:$0xff]
        %v205 = vld [vmem:[%s168 + $0x58] sm:$0xff]
        %v206 = vld [vmem:[%s168 + $0x60] sm:$0xff]
        %v207 = vld [vmem:[%s168 + $0x68] sm:$0xff]
        %v208 = vld [vmem:[%s168 + $0x70] sm:$0xff]
        %v209 = vld [vmem:[%s168 + $0x78] sm:$0xff]
        %v210 = vld [vmem:[%s168 + $0x80] sm:$0xff]
        %v211 = vld [vmem:[%s168 + $0x88] sm:$0xff]
        %v212 = vld [vmem:[%s168 + $0x90] sm:$0xff]
        %v213 = vld [vmem:[%s168 + $0x98] sm:$0xff]
        %v214 = vld [vmem:[%s168 + $0xa0] sm:$0xff]
        %v215 = vld [vmem:[%s168 + $0xa8] sm:$0xff]
        %v216 = vld [vmem:[%s168 + $0xb0] sm:$0xff]
        %v217 = vld [vmem:[%s168 + $0xb8] sm:$0xff]
        %v218 = vld [vmem:[%s168 + $0xc0] sm:$0xff]
        %v219 = vld [vmem:[%s168 + $0xc8] sm:$0xff]
        %v220 = vld [vmem:[%s168 + $0xd0] sm:$0xff]
        %v221 = vld [vmem:[%s168 + $0xd8] sm:$0xff]
        %v222 = vld [vmem:[%s168 + $0xe0] sm:$0xff]
        %v223 = vld [vmem:[%s168 + $0xe8] sm:$0xff]
        %v224 = vld [vmem:[%s168 + $0xf0] sm:$0xff]
        %v225 = vld [vmem:[%s168 + $0xf8] sm:$0xff]
        %v226 = vadd.f32 %v194, %v195
        %227 = vadd.xlane.f32.xlu0 %v226
        %v228 = vpop.xlane.xlu0 %227
        %v229 = vadd.f32 %v196, %v197
        %230 = vadd.xlane.f32.xlu0 %v229
        %v231 = vpop.xlane.xlu0 %230
        %v232 = vadd.f32 %v198, %v199
        %233 = vadd.xlane.f32.xlu0 %v232
        %v234 = vpop.xlane.xlu0 %233
        %v235 = vadd.f32 %v200, %v201
        %236 = vadd.xlane.f32.xlu0 %v235
        %v237 = vpop.xlane.xlu0 %236
        %v238 = vadd.f32 %v202, %v203
        %239 = vadd.xlane.f32.xlu0 %v238
        %v240 = vpop.xlane.xlu0 %239
        %v241 = vadd.f32 %v204, %v205
        %242 = vadd.xlane.f32.xlu0 %v241
        %v243 = vpop.xlane.xlu0 %242
        %v244 = vadd.f32 %v206, %v207
        %245 = vadd.xlane.f32.xlu0 %v244
        %v246 = vpop.xlane.xlu0 %245
        %v247 = vadd.f32 %v208, %v209
        %248 = vadd.xlane.f32.xlu0 %v247
        %v249 = vpop.xlane.xlu0 %248
        %v250 = vadd.f32 %v210, %v211
        %251 = vadd.xlane.f32.xlu0 %v250
        %v252 = vpop.xlane.xlu0 %251
        %v253 = vadd.f32 %v212, %v213
        %254 = vadd.xlane.f32.xlu0 %v253
        %v255 = vpop.xlane.xlu0 %254
        %v256 = vadd.f32 %v214, %v215
        %257 = vadd.xlane.f32.xlu0 %v256
        %v258 = vpop.xlane.xlu0 %257
        %v259 = vadd.f32 %v216, %v217
        %260 = vadd.xlane.f32.xlu0 %v259
        %v261 = vpop.xlane.xlu0 %260
        %v262 = vadd.f32 %v218, %v219
        %263 = vadd.xlane.f32.xlu0 %v262
        %v264 = vpop.xlane.xlu0 %263
        %v265 = vadd.f32 %v220, %v221
        %266 = vadd.xlane.f32.xlu0 %v265
        %v267 = vpop.xlane.xlu0 %266
        %v268 = vadd.f32 %v222, %v223
        %269 = vadd.xlane.f32.xlu0 %v268
        %v270 = vpop.xlane.xlu0 %269
        %v271 = vadd.f32 %v224, %v225
        %272 = vadd.xlane.f32.xlu0 %v271
        %v273 = vpop.xlane.xlu0 %272
        %v274 = vmul.f32 %v228, 0.00390625
        %v275 = vmul.f32 %v231, 0.00390625
        %v276 = vmul.f32 %v234, 0.00390625
        %v277 = vmul.f32 %v237, 0.00390625
        %v278 = vmul.f32 %v240, 0.00390625
        %v279 = vmul.f32 %v243, 0.00390625
        %v280 = vmul.f32 %v246, 0.00390625
        %v281 = vmul.f32 %v249, 0.00390625
        %v282 = vmul.f32 %v252, 0.00390625
        %v283 = vmul.f32 %v255, 0.00390625
        %v284 = vmul.f32 %v258, 0.00390625
        %v285 = vmul.f32 %v261, 0.00390625
        %v286 = vmul.f32 %v264, 0.00390625
        %v287 = vmul.f32 %v267, 0.00390625
        %v288 = vmul.f32 %v270, 0.00390625
        %v289 = vmul.f32 %v273, 0.00390625
        %v290 = vld [vmem:[%s1] sm:$0xff]
        %v291 = vld [vmem:[%s1 + $0x8] sm:$0xff]
        %v292 = vld [vmem:[%s1 + $0x10] sm:$0xff]
        %v293 = vld [vmem:[%s1 + $0x18] sm:$0xff]
        %v294 = vld [vmem:[%s2] sm:$0x3]
        %v311 = vlaneseq
        %v312 = vand.u32 %v311, 127
        %v313 = vperm.slane %v274, %v312
        %v314 = vadd.s32 %v312, 4294967288
        %v315 = vperm.slane %v275, %v314
        %vm316 = vcmask 130112
        %v317 = vsel %vm316, %v315, %v313
        %v318 = vadd.s32 %v312, 4294967280
        %v319 = vperm.slane %v276, %v318
        %vm320 = vcmask 195712
        %v321 = vsel %vm320, %v319, %v317
        %v322 = vadd.s32 %v312, 4294967272
        %v323 = vperm.slane %v277, %v322
        %vm324 = vcmask 261312
        %v325 = vsel %vm324, %v323, %v321
        %v326 = vperm.slane %v278, %v312
        %v327 = vperm.slane %v279, %v314
        %v328 = vsel %vm316, %v327, %v326
        %v329 = vperm.slane %v280, %v318
        %v330 = vsel %vm320, %v329, %v328
        %v331 = vperm.slane %v281, %v322
        %v332 = vsel %vm324, %v331, %v330
        %v333 = vperm.slane %v282, %v312
        %v334 = vperm.slane %v283, %v314
        %v335 = vsel %vm316, %v334, %v333
        %v336 = vperm.slane %v284, %v318
        %v337 = vsel %vm320, %v336, %v335
        %v338 = vperm.slane %v285, %v322
        %v339 = vsel %vm324, %v338, %v337
        %v340 = vperm.slane %v286, %v312
        %v341 = vperm.slane %v287, %v314
        %v342 = vsel %vm316, %v341, %v340
        %v343 = vperm.slane %v288, %v318
        %v344 = vsel %vm320, %v343, %v342
        %v345 = vperm.slane %v289, %v322
        %v346 = vsel %vm324, %v345, %v344
        %vm347 = vcmask 1041409
        %v348 = vsel %vm347, %v332, %v325
        %vm349 = vcmask 1042434
        %v350 = vsel %vm349, %v339, %v348
        %vm351 = vcmask 1043459
        %v352 = vsel %vm351, %v346, %v350
        %vm353 = vcmask 261120
        %v354 = vsel %vm353, %v352, 0
        %356 = vmatpush.msra.mxu0 0.0
        %357 = vmatpush.msra.mxu0 0.0
        %358 = vmatpush.msra.mxu0 0.0
        %359 = vmatpush.msra.mxu0 0.0
        %360 = vmatpush.msra.mxu0 0.0
        %361 = vmatpush.msra.mxu0 0.0
        %362 = vmatpush.msra.mxu0 0.0
        %363 = vmatpush.msra.mxu0 0.0
        %364 = vmatpush.msra.mxu0 0.0
        %365 = vmatpush.msra.mxu0 0.0
        %366 = vmatpush.msra.mxu0 0.0
        %367 = vmatpush.msra.mxu0 0.0
        %368 = vmatpush.msra.mxu0 %v293
        %369 = vmatpush.msra.mxu0 %v292
        %370 = vmatpush.msra.mxu0 %v291
        %371 = vmatpush.msra.mxu0 %v290
        %372 = vmatmul.f32.gmra.mxu0 %v354
        %v373 = vpop.f32.mrf.mxu0
        %v374 = vadd.f32 0.0, %v373
        %375 = vdwg.mxu0
        %v376 = vmax.f32 %v374, 0.0
        %vm377 = vcmask 15360
        %v379 = vsel %vm377, %v376, 0
        %vm381 = vcmask 1041408
        %v383 = vsel %vm381, %v294, 0
        %385 = vmatpush.msra.mxu0 0.0
        %386 = vmatpush.msra.mxu0 0.0
        %387 = vmatpush.msra.mxu0 0.0
        %388 = vmatpush.msra.mxu0 0.0
        %389 = vmatpush.msra.mxu0 0.0
        %390 = vmatpush.msra.mxu0 0.0
        %391 = vmatpush.msra.mxu0 0.0
        %392 = vmatpush.msra.mxu0 0.0
        %393 = vmatpush.msra.mxu0 0.0
        %394 = vmatpush.msra.mxu0 0.0
        %395 = vmatpush.msra.mxu0 0.0
        %396 = vmatpush.msra.mxu0 0.0
        %397 = vmatpush.msra.mxu0 0.0
        %398 = vmatpush.msra.mxu0 0.0
        %399 = vmatpush.msra.mxu0 0.0
        %400 = vmatpush.msra.mxu0 %v383
        %401 = vmatmul.f32.gmra.mxu0 %v379
        %v402 = vpop.f32.mrf.mxu0
        %v403 = vadd.f32 0.0, %v402
        %404 = vdwg.mxu0
        %v405 = vxor.u32 %v403, 2147483648
        %v406 = vmul.f32 %v405, 1.442695
        %v407 = vpow.pop %v406
        %v408 = vadd.f32 %v407, 1.0
        %v409 = vrcp.pop %v408
        %v410 = vmul.f32 %v408, %v409
        %v411 = vsub.f32 1.0, %v410
        %v412 = vmul.f32 %v409, %v411
        %v413 = vadd.f32 %v409, %v412
        %vm414 = vweird.f32 %v408
        %vm415 = vweird.f32 %v409
        %vm416 = vmor %vm414, %vm415
        %v417 = vsel %vm416, %v409, %v413
        %v418 = vand.u32 2147483647, %v408
        %vm419 = vcmp.eq.f32.partialorder %v418, 8.507059e+37
        %v420 = vand.u32 %v408, 2147483648
        %v421 = vor.u32 1.1754944e-38, %v420
        %v422 = vsel %vm419, %v421, %v417
        %v423 = vmul.f32 1.0, %v422
        %v424 = vperm.slane %v423, 0
        %v425 = vlaneseq
        %v426 = vshrl.u32 %v425, 7
        %428 = vset.pattern.permute.xlu0 %v426
        %429 = vperm.xlu0 %428, %v424
        %v430 = vpop.permute.xlu0 %429
        %v431 = vlaneseq
        %v432 = vshrl.u32 %v431, 7
        %v433 = vadd.s32 %v432, 8
        %434 = vset.pattern.permute.xlu0 %v433
        %435 = vperm.xlu0 %434, %v424
        %v436 = vpop.permute.xlu0 %435
        %v437 = vlaneseq
        %v438 = vshrl.u32 %v437, 7
        %v439 = vadd.s32 %v438, 16
        %440 = vset.pattern.permute.xlu0 %v439
        %441 = vperm.xlu0 %440, %v424
        %v442 = vpop.permute.xlu0 %441
        %v443 = vlaneseq
        %v444 = vshrl.u32 %v443, 7
        %v445 = vadd.s32 %v444, 24
        %446 = vset.pattern.permute.xlu0 %v445
        %447 = vperm.xlu0 %446, %v424
        %v448 = vpop.permute.xlu0 %447
        %v449 = vperm.slane %v423, 1
        %v450 = vlaneseq
        %v451 = vshrl.u32 %v450, 7
        %453 = vset.pattern.permute.xlu0 %v451
        %454 = vperm.xlu0 %453, %v449
        %v455 = vpop.permute.xlu0 %454
        %v456 = vlaneseq
        %v457 = vshrl.u32 %v456, 7
        %v458 = vadd.s32 %v457, 8
        %459 = vset.pattern.permute.xlu0 %v458
        %460 = vperm.xlu0 %459, %v449
        %v461 = vpop.permute.xlu0 %460
        %v462 = vlaneseq
        %v463 = vshrl.u32 %v462, 7
        %v464 = vadd.s32 %v463, 16
        %465 = vset.pattern.permute.xlu0 %v464
        %466 = vperm.xlu0 %465, %v449
        %v467 = vpop.permute.xlu0 %466
        %v468 = vlaneseq
        %v469 = vshrl.u32 %v468, 7
        %v470 = vadd.s32 %v469, 24
        %471 = vset.pattern.permute.xlu0 %v470
        %472 = vperm.xlu0 %471, %v449
        %v473 = vpop.permute.xlu0 %472
        %v474 = vperm.slane %v423, 2
        %v475 = vlaneseq
        %v476 = vshrl.u32 %v475, 7
        %478 = vset.pattern.permute.xlu0 %v476
        %479 = vperm.xlu0 %478, %v474
        %v480 = vpop.permute.xlu0 %479
        %v481 = vlaneseq
        %v482 = vshrl.u32 %v481, 7
        %v483 = vadd.s32 %v482, 8
        %484 = vset.pattern.permute.xlu0 %v483
        %485 = vperm.xlu0 %484, %v474
        %v486 = vpop.permute.xlu0 %485
        %v487 = vlaneseq
        %v488 = vshrl.u32 %v487, 7
        %v489 = vadd.s32 %v488, 16
        %490 = vset.pattern.permute.xlu0 %v489
        %491 = vperm.xlu0 %490, %v474
        %v492 = vpop.permute.xlu0 %491
        %v493 = vlaneseq
        %v494 = vshrl.u32 %v493, 7
        %v495 = vadd.s32 %v494, 24
        %496 = vset.pattern.permute.xlu0 %v495
        %497 = vperm.xlu0 %496, %v474
        %v498 = vpop.permute.xlu0 %497
        %v499 = vperm.slane %v423, 3
        %v500 = vlaneseq
        %v501 = vshrl.u32 %v500, 7
        %503 = vset.pattern.permute.xlu0 %v501
        %504 = vperm.xlu0 %503, %v499
        %v505 = vpop.permute.xlu0 %504
        %v506 = vlaneseq
        %v507 = vshrl.u32 %v506, 7
        %v508 = vadd.s32 %v507, 8
        %509 = vset.pattern.permute.xlu0 %v508
        %510 = vperm.xlu0 %509, %v499
        %v511 = vpop.permute.xlu0 %510
        %v512 = vlaneseq
        %v513 = vshrl.u32 %v512, 7
        %v514 = vadd.s32 %v513, 16
        %515 = vset.pattern.permute.xlu0 %v514
        %516 = vperm.xlu0 %515, %v499
        %v517 = vpop.permute.xlu0 %516
        %v518 = vlaneseq
        %v519 = vshrl.u32 %v518, 7
        %v520 = vadd.s32 %v519, 24
        %521 = vset.pattern.permute.xlu0 %v520
        %522 = vperm.xlu0 %521, %v499
        %v523 = vpop.permute.xlu0 %522
        %v524 = vmul.f32 %v194, %v430
        %v525 = vmul.f32 %v195, %v430
        %v526 = vmul.f32 %v196, %v436
        %v527 = vmul.f32 %v197, %v436
        %v528 = vmul.f32 %v198, %v442
        %v529 = vmul.f32 %v199, %v442
        %v530 = vmul.f32 %v200, %v448
        %v531 = vmul.f32 %v201, %v448
        %v532 = vmul.f32 %v202, %v455
        %v533 = vmul.f32 %v203, %v455
        %v534 = vmul.f32 %v204, %v461
        %v535 = vmul.f32 %v205, %v461
        %v536 = vmul.f32 %v206, %v467
        %v537 = vmul.f32 %v207, %v467
        %v538 = vmul.f32 %v208, %v473
        %v539 = vmul.f32 %v209, %v473
        %v540 = vmul.f32 %v210, %v480
        %v541 = vmul.f32 %v211, %v480
        %v542 = vmul.f32 %v212, %v486
        %v543 = vmul.f32 %v213, %v486
        %v544 = vmul.f32 %v214, %v492
        %v545 = vmul.f32 %v215, %v492
        %v546 = vmul.f32 %v216, %v498
        %v547 = vmul.f32 %v217, %v498
        %v548 = vmul.f32 %v218, %v505
        %v549 = vmul.f32 %v219, %v505
        %v550 = vmul.f32 %v220, %v511
        %v551 = vmul.f32 %v221, %v511
        %v552 = vmul.f32 %v222, %v517
        %v553 = vmul.f32 %v223, %v517
        %v554 = vmul.f32 %v224, %v523
        %v555 = vmul.f32 %v225, %v523
        %556 = vst [vmem:[%s191] sm:$0xff] %v524
        %557 = vst [vmem:[%s191 + $0x8] sm:$0xff] %v525
        %558 = vst [vmem:[%s191 + $0x10] sm:$0xff] %v526
        %559 = vst [vmem:[%s191 + $0x18] sm:$0xff] %v527
        %560 = vst [vmem:[%s191 + $0x20] sm:$0xff] %v528
        %561 = vst [vmem:[%s191 + $0x28] sm:$0xff] %v529
        %562 = vst [vmem:[%s191 + $0x30] sm:$0xff] %v530
        %563 = vst [vmem:[%s191 + $0x38] sm:$0xff] %v531
        %564 = vst [vmem:[%s191 + $0x40] sm:$0xff] %v532
        %565 = vst [vmem:[%s191 + $0x48] sm:$0xff] %v533
        %566 = vst [vmem:[%s191 + $0x50] sm:$0xff] %v534
        %567 = vst [vmem:[%s191 + $0x58] sm:$0xff] %v535
        %568 = vst [vmem:[%s191 + $0x60] sm:$0xff] %v536
        %569 = vst [vmem:[%s191 + $0x68] sm:$0xff] %v537
        %570 = vst [vmem:[%s191 + $0x70] sm:$0xff] %v538
        %571 = vst [vmem:[%s191 + $0x78] sm:$0xff] %v539
        %572 = vst [vmem:[%s191 + $0x80] sm:$0xff] %v540
        %573 = vst [vmem:[%s191 + $0x88] sm:$0xff] %v541
        %574 = vst [vmem:[%s191 + $0x90] sm:$0xff] %v542
        %575 = vst [vmem:[%s191 + $0x98] sm:$0xff] %v543
        %576 = vst [vmem:[%s191 + $0xa0] sm:$0xff] %v544
        %577 = vst [vmem:[%s191 + $0xa8] sm:$0xff] %v545
        %578 = vst [vmem:[%s191 + $0xb0] sm:$0xff] %v546
        %579 = vst [vmem:[%s191 + $0xb8] sm:$0xff] %v547
        %580 = vst [vmem:[%s191 + $0xc0] sm:$0xff] %v548
        %581 = vst [vmem:[%s191 + $0xc8] sm:$0xff] %v549
        %582 = vst [vmem:[%s191 + $0xd0] sm:$0xff] %v550
        %583 = vst [vmem:[%s191 + $0xd8] sm:$0xff] %v551
        %584 = vst [vmem:[%s191 + $0xe0] sm:$0xff] %v552
        %585 = vst [vmem:[%s191 + $0xe8] sm:$0xff] %v553
        %586 = vst [vmem:[%s191 + $0xf0] sm:$0xff] %v554
        %587 = vst [vmem:[%s191 + $0xf8] sm:$0xff] %v555
        %s588 = sand.u32 %s96, 1
        %s589 = scalar_lea.sflag [#allocation4], %s588
        %s590 = sand.u32 %s96, 1
        %s591 = smul.addr %s590, 256
        %s592 = scalar_lea.vmem [#allocation5], %s591
        // Predicated region
        $region37: #{tpu_custom_call.1} parent=31 // pred_check
          %p593 = pneg %p106
        $region38: #{tpu_custom_call.1} parent=31 // pred_check_branch
          %595 = sbr.rel (%p593) target = $region40
        $region39: #{tpu_custom_call.1} parent=31 // pred_region
          %s596 = smul.u32 4, %s20
          %598 = vsyncadd %s589, 0
          %s599 = smul.addr %s596, 8
          %s600 = smul.addr %s599, 8
          %s601 = scalar_lea.hbm %s3, %s600
          %s602 = sshll.u32 %s592, 4
          %s603 = int_to_ptr.vmem [resolvable:$true] %s602
          %s604 = sshll.u32 %s601, 4
          %s605 = int_to_ptr.hbm [resolvable:$true] %s604
          %610 = dma.vmem_to_hbm [thread:$0]  %s603, 4096, %s605, %s589, 256, 256, 16
        $region40: #{tpu_custom_call.1} parent=31 // pred_fallthru
          _
      $region32: #{tpu_custom_call.1} parent=5 // pred_fallthru
        _
      %p611 = scmp.le.s32.totalorder 2, %s15
      // Predicated region
      $region41: #{tpu_custom_call.1} parent=5 // pred_check
        %p612 = pneg %p611
      $region42: #{tpu_custom_call.1} parent=5 // pred_check_branch
        %614 = sbr.rel (%p612) target = $region44
      $region43: #{tpu_custom_call.1} parent=5 // pred_region
        %s615 = ssub.s32 %s15, 2
        // Predicated region
        $region45: #{tpu_custom_call.1} parent=43 // pred_check
          %p616 = pneg %p112
        $region46: #{tpu_custom_call.1} parent=43 // pred_check_branch
          %618 = sbr.rel (%p616) target = $region48
        $region47: #{tpu_custom_call.1} parent=43 // pred_region
          %s619 = sand.u32 %s97, 1
          %s620 = scalar_lea.sflag [#allocation4], %s619
          %s621 = sand.u32 %s97, 1
          %s622 = smul.addr %s621, 256
          %s623 = scalar_lea.vmem [#allocation5], %s622
          %625 = dma.done %s620, 4096
        $region48: #{tpu_custom_call.1} parent=43 // pred_fallthru
          _
      $region44: #{tpu_custom_call.1} parent=5 // pred_fallthru
        _
    $region6: #{tpu_custom_call.1} parent=1 // loop_footer
      %s19 = sadd.s32 1, %s15
    $region7: #{tpu_custom_call.1} parent=1 // loop_footer_branch
      %14 = sbr.rel target = $region3
    $region8: #{tpu_custom_call.1} parent=1 // loop_exit
      _
    %626 = vsyncpa [#allocation3], 1
    %s627 = scalar_lea.sflag [#allocation3], 1
    %628 = vsyncpa %s627, 1
    %629 = vsyncpa [#allocation4], 1
    %s630 = scalar_lea.sflag [#allocation4], 1
    %631 = vsyncpa %s630, 1

</llo_original>
